<compile_context>
chip_gen: v7x
topology: tpu7x:2x2x1
jax: 0.10.0
libtpu: 0.0.40
codegen_flags: <defaults>
</compile_context>

<pallas_src>
import functools

import jax
import jax.numpy as jnp
from jax.experimental import pallas as pl
from jax.experimental.pallas import tpu as pltpu


# --------------------------------- kernel ---------------------------------

def _sepconv_kernel(x_ref, wdw_ref, wpw_ref, o_ref, *, K, s, C, TH):
    """Fused depthwise KxK (stride folded) + pointwise 1x1 conv for one output row tile.

    x_ref  : (Hq, Wq, s*s*C)  zero-padded, space-to-depth folded input image (VMEM resident)
    wdw_ref: (K*K, C)         depthwise weights, row kh*K+kw
    wpw_ref: (C, Cout)        pointwise weight
    o_ref  : (TH, Wo, Cout)   output row tile
    """
    D = (K - 1) // s                      # extra halo rows/cols in folded space
    Wo = o_ref.shape[1]
    Cout = o_ref.shape[2]

    h0 = pl.program_id(1) * TH            # first folded input row needed by this tile
    xw = x_ref[pl.ds(h0, TH + D), :, :]   # (TH+D, Wq, s*s*C) window, loaded once
    wdw = wdw_ref[...]                    # (K*K, C)

    # Depthwise accumulation on the VPU: every tap is a dense static slice of xw.
    acc = jnp.zeros((TH, Wo, C), jnp.float32)
    for kh in range(K):
        for kw in range(K):
            ph = (kh % s) * s + (kw % s)                      # space-to-depth phase
            tap = xw[kh // s:kh // s + TH,
                     kw // s:kw // s + Wo,
                     ph * C:(ph + 1) * C]                     # (TH, Wo, C)
            w_tap = wdw[kh * K + kw:kh * K + kw + 1, :].reshape(1, 1, C)
            acc = acc + tap * w_tap

    # Pointwise 1x1 conv = channel matmul on the MXU, fused in the same kernel.
    y = jnp.dot(acc.reshape(TH * Wo, C), wpw_ref[...],
                preferred_element_type=jnp.float32)           # (TH*Wo, Cout)
    o_ref[...] = y.reshape(TH, Wo, Cout).astype(o_ref.dtype)


# --------------------------------- wrapper ---------------------------------

def _largest_divisor(n, cap):
    for t in range(min(cap, n), 0, -1):
        if n % t == 0:
            return t
    return 1


def separable_conv2d(x_nchw, w_dw_ckk, w_pw_oc, *, stride, padding, h_tile=None):
    """SeparableConv2d forward. x: (N,C,H,W); w_dw: (C,K,K); w_pw: (Cout,C). Returns NCHW."""
    N, C, H, W = x_nchw.shape
    K = w_dw_ckk.shape[-1]
    Cout = w_pw_oc.shape[0]
    s, p = stride, padding

    Ho = (H + 2 * p - K) // s + 1
    Wo = (W + 2 * p - K) // s + 1
    D = (K - 1) // s
    # folded (space-to-depth) extents; padded so every tile's halo window is in bounds
    Hq = max(-(-(H + 2 * p) // s), Ho + D)
    Wq = max(-(-(W + 2 * p) // s), Wo + D)

    # NCHW -> NHWC, zero-pad, and fold the stride via space-to-depth (single XLA rearrangement).
    x = jnp.transpose(x_nchw, (0, 2, 3, 1)).astype(jnp.float32)
    x = jnp.pad(x, ((0, 0), (p, s * Hq - H - p), (p, s * Wq - W - p), (0, 0)))
    x = x.reshape(N, Hq, s, Wq, s, C).transpose(0, 1, 3, 2, 4, 5).reshape(N, Hq, Wq, s * s * C)

    w_dw = w_dw_ckk.reshape(C, K * K).T.astype(jnp.float32)   # (K*K, C), row = kh*K+kw
    w_pw = w_pw_oc.T.astype(jnp.float32)                      # (C, Cout)

    if h_tile is None or Ho % h_tile != 0:
        h_tile = _largest_divisor(Ho, 8 if h_tile is None else h_tile)
    TH = h_tile
    grid = (N, Ho // TH)

    kern = functools.partial(_sepconv_kernel, K=K, s=s, C=C, TH=TH)
    out = pl.pallas_call(
        kern,
        out_shape=jax.ShapeDtypeStruct((N, Ho, Wo, Cout), jnp.float32),
        grid=grid,
        in_specs=[
            # one folded image per batch index; revisited (not re-DMA'd) across row tiles
            pl.BlockSpec((None, Hq, Wq, s * s * C), lambda n, th: (n, 0, 0, 0)),
            pl.BlockSpec((K * K, C), lambda n, th: (0, 0)),     # VMEM-resident weights
            pl.BlockSpec((C, Cout), lambda n, th: (0, 0)),
        ],
        out_specs=pl.BlockSpec((None, TH, Wo, Cout), lambda n, th: (n, th, 0, 0)),
        compiler_params=pltpu.CompilerParams(
            dimension_semantics=("parallel", "arbitrary")),
    )(x, w_dw, w_pw)

    return jnp.transpose(out, (0, 3, 1, 2))                    # NHWC -> NCHW


# ------------------------------ pure-JAX reference ------------------------------

def ref_separable_conv2d(x_nchw, w_dw_ckk, w_pw_oc, *, stride, padding):
    C = x_nchw.shape[1]
    dn = ('NCHW', 'OIHW', 'NCHW')
    y = jax.lax.conv_general_dilated(
        x_nchw, w_dw_ckk[:, None, :, :], (stride, stride),
        [(padding, padding), (padding, padding)],
        dimension_numbers=dn, feature_group_count=C,
        precision=jax.lax.Precision.HIGHEST)
    y = jax.lax.conv_general_dilated(
        y, w_pw_oc[:, :, None, None], (1, 1), 'VALID',
        dimension_numbers=dn, precision=jax.lax.Precision.HIGHEST)
    return y


# ----------------------------------- main -----------------------------------

if __name__ == "__main__":
    key = jax.random.PRNGKey(0)
    k1, k2, k3, k4, k5 = jax.random.split(key, 5)

    # Config 1: the NASNet-style reduction case (K=3, stride=2, pad=1).
    N, C, H, W = 2, 4, 16, 16
    Cout, K, stride, pad = 8, 3, 2, 1
    x = jax.random.normal(k1, (N, C, H, W), jnp.float32)
    w_dw = 0.1 * jax.random.normal(k2, (C, K, K), jnp.float32)       # depthwise (C,1,K,K) squeezed
    w_pw = 0.1 * jax.random.normal(k3, (Cout, C), jnp.float32)       # pointwise (Cout,C,1,1) squeezed

    fn1 = jax.jit(functools.partial(separable_conv2d, stride=stride, padding=pad, h_tile=4))
    out1 = fn1(x, w_dw, w_pw)
    jax.block_until_ready(out1)
    ref1 = ref_separable_conv2d(x, w_dw, w_pw, stride=stride, padding=pad)
    assert out1.shape == (N, Cout, (H + 2 * pad - K) // stride + 1,
                          (W + 2 * pad - K) // stride + 1), out1.shape
    assert bool(jnp.all(jnp.isfinite(out1)))
    err1 = float(jnp.max(jnp.abs(out1 - ref1)))
    assert err1 < 5e-3, f"config1 max abs err {err1}"

    # Config 2: stride-1 path (K=5, stride=1, pad=2).
    K2, s2, p2, Cout2 = 5, 1, 2, 16
    w_dw2 = 0.1 * jax.random.normal(k4, (C, K2, K2), jnp.float32)
    w_pw2 = 0.1 * jax.random.normal(k5, (Cout2, C), jnp.float32)
    fn2 = jax.jit(functools.partial(separable_conv2d, stride=s2, padding=p2))
    out2 = fn2(x, w_dw2, w_pw2)
    jax.block_until_ready(out2)
    ref2 = ref_separable_conv2d(x, w_dw2, w_pw2, stride=s2, padding=p2)
    err2 = float(jnp.max(jnp.abs(out2 - ref2)))
    assert err2 < 5e-3, f"config2 max abs err {err2}"

    print("KERNEL_OK")
</pallas_src>

<mosaic_0001>
module attributes {stable_mosaic.version = 11 : i64} {
  func.func @_sepconv_kernel(%arg0: i32, %arg1: i32, %arg2: memref<1x9x9x16xf32, #tpu.memory_space<vmem>>, %arg3: memref<9x4xf32, #tpu.memory_space<vmem>>, %arg4: memref<4x8xf32, #tpu.memory_space<vmem>>, %arg5: memref<1x4x8x8xf32, #tpu.memory_space<vmem>>) attributes {dimension_semantics = [#tpu.dimension_semantics<parallel>, #tpu.dimension_semantics<arbitrary>], iteration_bounds = array<i64: 2, 2>, scalar_prefetch = 0 : i64, scratch_operands = 0 : i64, tpu.core_type = #tpu.core_type<tc>, window_params = [{transform_indices = @transform_0, window_bounds = array<i64: 1, 9, 9, 16>}, {pipeline_mode = #tpu.pipeline_mode<synchronous>, transform_indices = @transform_1, window_bounds = array<i64: 9, 4>}, {pipeline_mode = #tpu.pipeline_mode<synchronous>, transform_indices = @transform_2, window_bounds = array<i64: 4, 8>}, {transform_indices = @transform_3, window_bounds = array<i64: 1, 4, 8, 8>}]} {
    %c4_i32 = arith.constant 4 : i32
    %0 = arith.muli %arg1, %c4_i32 : i32
    %c0 = arith.constant 0 : index
    %1 = arith.index_cast %0 : i32 to index
    %c0_0 = arith.constant 0 : index
    %c0_1 = arith.constant 0 : index
    %2 = vector.load %arg2[%c0, %1, %c0_0, %c0_1] : memref<1x9x9x16xf32, #tpu.memory_space<vmem>>, vector<1x5x9x16xf32>
    %3 = vector.shape_cast %2 : vector<1x5x9x16xf32> to vector<5x9x16xf32>
    %c0_2 = arith.constant 0 : index
    %c0_3 = arith.constant 0 : index
    %4 = vector.load %arg3[%c0_2, %c0_3] : memref<9x4xf32, #tpu.memory_space<vmem>>, vector<9x4xf32>
    %cst = arith.constant 0.000000e+00 : f32
    %5 = vector.broadcast %cst : f32 to vector<4x8x4xf32>
    %6 = vector.extract_strided_slice %3 {offsets = [0, 0, 0], sizes = [4, 8, 4], strides = [1, 1, 1]} : vector<5x9x16xf32> to vector<4x8x4xf32>
    %7 = vector.extract_strided_slice %4 {offsets = [0, 0], sizes = [1, 4], strides = [1, 1]} : vector<9x4xf32> to vector<1x4xf32>
    %8 = vector.shape_cast %7 : vector<1x4xf32> to vector<1x1x4xf32>
    %9 = vector.broadcast %8 : vector<1x1x4xf32> to vector<4x8x4xf32>
    %10 = arith.mulf %6, %9 : vector<4x8x4xf32>
    %11 = arith.addf %5, %10 : vector<4x8x4xf32>
    %12 = vector.extract_strided_slice %3 {offsets = [0, 0, 4], sizes = [4, 8, 4], strides = [1, 1, 1]} : vector<5x9x16xf32> to vector<4x8x4xf32>
    %13 = vector.extract_strided_slice %4 {offsets = [1, 0], sizes = [1, 4], strides = [1, 1]} : vector<9x4xf32> to vector<1x4xf32>
    %14 = vector.shape_cast %13 : vector<1x4xf32> to vector<1x1x4xf32>
    %15 = vector.broadcast %14 : vector<1x1x4xf32> to vector<4x8x4xf32>
    %16 = arith.mulf %12, %15 : vector<4x8x4xf32>
    %17 = arith.addf %11, %16 : vector<4x8x4xf32>
    %18 = vector.extract_strided_slice %3 {offsets = [0, 1, 0], sizes = [4, 8, 4], strides = [1, 1, 1]} : vector<5x9x16xf32> to vector<4x8x4xf32>
    %19 = vector.extract_strided_slice %4 {offsets = [2, 0], sizes = [1, 4], strides = [1, 1]} : vector<9x4xf32> to vector<1x4xf32>
    %20 = vector.shape_cast %19 : vector<1x4xf32> to vector<1x1x4xf32>
    %21 = vector.broadcast %20 : vector<1x1x4xf32> to vector<4x8x4xf32>
    %22 = arith.mulf %18, %21 : vector<4x8x4xf32>
    %23 = arith.addf %17, %22 : vector<4x8x4xf32>
    %24 = vector.extract_strided_slice %3 {offsets = [0, 0, 8], sizes = [4, 8, 4], strides = [1, 1, 1]} : vector<5x9x16xf32> to vector<4x8x4xf32>
    %25 = vector.extract_strided_slice %4 {offsets = [3, 0], sizes = [1, 4], strides = [1, 1]} : vector<9x4xf32> to vector<1x4xf32>
    %26 = vector.shape_cast %25 : vector<1x4xf32> to vector<1x1x4xf32>
    %27 = vector.broadcast %26 : vector<1x1x4xf32> to vector<4x8x4xf32>
    %28 = arith.mulf %24, %27 : vector<4x8x4xf32>
    %29 = arith.addf %23, %28 : vector<4x8x4xf32>
    %30 = vector.extract_strided_slice %3 {offsets = [0, 0, 12], sizes = [4, 8, 4], strides = [1, 1, 1]} : vector<5x9x16xf32> to vector<4x8x4xf32>
    %31 = vector.extract_strided_slice %4 {offsets = [4, 0], sizes = [1, 4], strides = [1, 1]} : vector<9x4xf32> to vector<1x4xf32>
    %32 = vector.shape_cast %31 : vector<1x4xf32> to vector<1x1x4xf32>
    %33 = vector.broadcast %32 : vector<1x1x4xf32> to vector<4x8x4xf32>
    %34 = arith.mulf %30, %33 : vector<4x8x4xf32>
    %35 = arith.addf %29, %34 : vector<4x8x4xf32>
    %36 = vector.extract_strided_slice %3 {offsets = [0, 1, 8], sizes = [4, 8, 4], strides = [1, 1, 1]} : vector<5x9x16xf32> to vector<4x8x4xf32>
    %37 = vector.extract_strided_slice %4 {offsets = [5, 0], sizes = [1, 4], strides = [1, 1]} : vector<9x4xf32> to vector<1x4xf32>
    %38 = vector.shape_cast %37 : vector<1x4xf32> to vector<1x1x4xf32>
    %39 = vector.broadcast %38 : vector<1x1x4xf32> to vector<4x8x4xf32>
    %40 = arith.mulf %36, %39 : vector<4x8x4xf32>
    %41 = arith.addf %35, %40 : vector<4x8x4xf32>
    %42 = vector.extract_strided_slice %3 {offsets = [1, 0, 0], sizes = [4, 8, 4], strides = [1, 1, 1]} : vector<5x9x16xf32> to vector<4x8x4xf32>
    %43 = vector.extract_strided_slice %4 {offsets = [6, 0], sizes = [1, 4], strides = [1, 1]} : vector<9x4xf32> to vector<1x4xf32>
    %44 = vector.shape_cast %43 : vector<1x4xf32> to vector<1x1x4xf32>
    %45 = vector.broadcast %44 : vector<1x1x4xf32> to vector<4x8x4xf32>
    %46 = arith.mulf %42, %45 : vector<4x8x4xf32>
    %47 = arith.addf %41, %46 : vector<4x8x4xf32>
    %48 = vector.extract_strided_slice %3 {offsets = [1, 0, 4], sizes = [4, 8, 4], strides = [1, 1, 1]} : vector<5x9x16xf32> to vector<4x8x4xf32>
    %49 = vector.extract_strided_slice %4 {offsets = [7, 0], sizes = [1, 4], strides = [1, 1]} : vector<9x4xf32> to vector<1x4xf32>
    %50 = vector.shape_cast %49 : vector<1x4xf32> to vector<1x1x4xf32>
    %51 = vector.broadcast %50 : vector<1x1x4xf32> to vector<4x8x4xf32>
    %52 = arith.mulf %48, %51 : vector<4x8x4xf32>
    %53 = arith.addf %47, %52 : vector<4x8x4xf32>
    %54 = vector.extract_strided_slice %3 {offsets = [1, 1, 0], sizes = [4, 8, 4], strides = [1, 1, 1]} : vector<5x9x16xf32> to vector<4x8x4xf32>
    %55 = vector.extract_strided_slice %4 {offsets = [8, 0], sizes = [1, 4], strides = [1, 1]} : vector<9x4xf32> to vector<1x4xf32>
    %56 = vector.shape_cast %55 : vector<1x4xf32> to vector<1x1x4xf32>
    %57 = vector.broadcast %56 : vector<1x1x4xf32> to vector<4x8x4xf32>
    %58 = arith.mulf %54, %57 : vector<4x8x4xf32>
    %59 = arith.addf %53, %58 : vector<4x8x4xf32>
    %60 = vector.shape_cast %59 : vector<4x8x4xf32> to vector<32x4xf32>
    %c0_4 = arith.constant 0 : index
    %c0_5 = arith.constant 0 : index
    %61 = vector.load %arg4[%c0_4, %c0_5] : memref<4x8xf32, #tpu.memory_space<vmem>>, vector<4x8xf32>
    %cst_6 = arith.constant dense<0.000000e+00> : vector<32x8xf32>
    %62 = tpu.matmul %60, %61, %cst_6 {dimension_numbers = #tpu.dot_dimension_numbers<[1], [0], [0], [1], [0, 0, 1, 1], [], []>} : vector<32x4xf32>, vector<4x8xf32>, vector<32x8xf32> -> vector<32x8xf32>
    %63 = vector.shape_cast %62 : vector<32x8xf32> to vector<4x8x8xf32>
    %c0_7 = arith.constant 0 : index
    %c0_8 = arith.constant 0 : index
    %c0_9 = arith.constant 0 : index
    %c0_10 = arith.constant 0 : index
    %64 = vector.load %arg5[%c0_7, %c0_8, %c0_9, %c0_10] : memref<1x4x8x8xf32, #tpu.memory_space<vmem>>, vector<1x4x8x8xf32>
    %65 = vector.shape_cast %64 : vector<1x4x8x8xf32> to vector<4x8x8xf32>
    %66 = vector.shape_cast %63 : vector<4x8x8xf32> to vector<1x4x8x8xf32>
    tpu.vector_store %arg5[%c0_7, %c0_8, %c0_9, %c0_10], %66 {strides = array<i32>} : memref<1x4x8x8xf32, #tpu.memory_space<vmem>>, vector<1x4x8x8xf32>,
    return
  }
  func.func @transform_0(%arg0: i32, %arg1: i32) -> (i32, i32, i32, i32) {
    %c0_i32 = arith.constant 0 : i32
    %c0_i32_0 = arith.constant 0 : i32
    %c0_i32_1 = arith.constant 0 : i32
    %c0_i32_2 = arith.constant 0 : i32
    return %arg0, %c0_i32, %c0_i32_0, %c0_i32_1 : i32, i32, i32, i32
  }
  func.func @transform_1(%arg0: i32, %arg1: i32) -> (i32, i32) {
    %c0_i32 = arith.constant 0 : i32
    %c0_i32_0 = arith.constant 0 : i32
    %c0_i32_1 = arith.constant 0 : i32
    return %c0_i32, %c0_i32_0 : i32, i32
  }
  func.func @transform_2(%arg0: i32, %arg1: i32) -> (i32, i32) {
    %c0_i32 = arith.constant 0 : i32
    %c0_i32_0 = arith.constant 0 : i32
    %c0_i32_1 = arith.constant 0 : i32
    return %c0_i32, %c0_i32_0 : i32, i32
  }
  func.func @transform_3(%arg0: i32, %arg1: i32) -> (i32, i32, i32, i32) {
    %c0_i32 = arith.constant 0 : i32
    %c0_i32_0 = arith.constant 0 : i32
    %c0_i32_1 = arith.constant 0 : i32
    return %arg0, %arg1, %c0_i32, %c0_i32_0 : i32, i32, i32, i32
  }
}

</mosaic_0001>

<llo_original>
// kernel: separable_conv2d.1
$region0: #{separable_conv2d.1}
  #allocation0 [shape = 'u32[]', space=smem, size = 0x4, offset = 0x4, fixed_abs, tag = 'smem constant byte address 0x4 - core index']
  #allocation1 [shape = 'u32[144,128]{1,0:T(1,128)}', space=vmem, size = 0x12000, scoped, tag = 'internal scratch']
  %s0 = inlined_call_operand.vmem [shape: f32[2,9,9,16], index: 0, kind: input, shape index: {}]
  %s1 = inlined_call_operand.vmem [shape: f32[9,4], index: 1, kind: input, shape index: {}]
  %s2 = inlined_call_operand.vmem [shape: f32[4,8], index: 2, kind: input, shape index: {}]
  %s3 = inlined_call_operand.vmem [shape: f32[2,8,8,8], index: 3, kind: output, shape index: {}]
  %s4 = sld [smem:[#allocation0]]
  $region45: #{separable_conv2d.1} parent=0
    _
  %s6 = ssub.s32 1, %s4
  %s7 = scalar_select 0, %s6, %s4
  loop: start=0, step=1, limit=6
  $region2: #{separable_conv2d.1} parent=0 // loop_pre_header
    _
  $region3: #{separable_conv2d.1} parent=0 // loop_header
    %s9 = sphi 0, %s13
    %p10 = scmp.ge.s32.totalorder %s9, 6
    %s16 = sphi 0, %s28
    %s17 = sphi 0, %s24
    %s18 = sphi 0, %s16
    %s19 = sphi 0, %s17
    %s20 = sphi 0, %s18
    %s21 = sphi 0, %s19
    %s31 = sphi 0, %s33
    %s34 = sphi 0, %s31
    %s35 = sphi 0, %s34
    %s51 = sphi 0, %s35
    %s55 = sphi 0, %s55
    %s57 = sphi 0, %s55
    %s58 = sphi 0, %s57
    %s72 = sphi 0, %s58
    %s76 = sphi 0, %s76
    %s78 = sphi 0, %s76
    %s79 = sphi 0, %s78
    %s93 = sphi 0, %s79
    %s101 = sphi 0, %s103
    %s104 = sphi 0, %s101
    %s105 = sphi 0, %s104
    %s121 = sphi 0, %s105
  $region4: #{separable_conv2d.1} parent=0 // loop_header_branch
    %12 = sbr.rel (%p10) target = $region8
  $region5: #{separable_conv2d.1} parent=0 // loop_body
    %s14 = ssub.s32 %s9, 1
    %s15 = ssub.s32 %s9, 2
    %s22 = sadd.s32 1, %s17
    %p23 = scmp.ge.s32.totalorder %s22, 2
    %s24 = scalar_select %p23, 0, %s22
    %s25 = sadd.s32 1, %s16
    %s26 = scalar_select %p23, %s25, %s16
    %p27 = scmp.ge.s32.totalorder %s26, 2
    %s28 = scalar_select %p27, 0, %s26
    %s29 = ssub.s32 %s16, %s28
    %p30 = scmp.eq.s32.totalorder %s29, 0
    %s32 = sadd.s32 %s31, 1
    %s33 = scalar_select %p30, %s31, %s32
    %p36 = pneg %p30
    %p37 = scmp.eq.s32.totalorder %s9, 3
    %p38 = por %p36, %p37
    %p39 = scmp.ne.s32.totalorder %s31, %s34
    %p40 = scmp.eq.s32.totalorder %s9, 0
    %p41 = por %p39, %p40
    %p42 = scmp.ne.s32.totalorder %s31, %s34
    %p43 = scmp.eq.s32.totalorder %s14, 3
    %p44 = por %p42, %p43
    %p45 = scmp.ne.s32.totalorder %s34, %s35
    %p46 = scmp.eq.s32.totalorder %s14, 0
    %p47 = por %p45, %p46
    %p48 = scmp.ne.s32.totalorder %s34, %s35
    %p49 = scmp.eq.s32.totalorder %s15, 3
    %p50 = por %p48, %p49
    %p52 = scmp.ne.s32.totalorder %s35, %s51
    %p53 = scmp.eq.s32.totalorder %s15, 0
    %p54 = por %p52, %p53
    %s56 = sadd.s32 %s55, 1
    %p59 = scmp.eq.s32.totalorder %s9, 3
    %p60 = scmp.ne.s32.totalorder %s55, %s57
    %p61 = scmp.eq.s32.totalorder %s9, 0
    %p62 = por %p60, %p61
    %p63 = scmp.ne.s32.totalorder %s55, %s57
    %p64 = scmp.eq.s32.totalorder %s14, 3
    %p65 = por %p63, %p64
    %p66 = scmp.ne.s32.totalorder %s57, %s58
    %p67 = scmp.eq.s32.totalorder %s14, 0
    %p68 = por %p66, %p67
    %p69 = scmp.ne.s32.totalorder %s57, %s58
    %p70 = scmp.eq.s32.totalorder %s15, 3
    %p71 = por %p69, %p70
    %p73 = scmp.ne.s32.totalorder %s58, %s72
    %p74 = scmp.eq.s32.totalorder %s15, 0
    %p75 = por %p73, %p74
    %s77 = sadd.s32 %s76, 1
    %p80 = scmp.eq.s32.totalorder %s9, 3
    %p81 = scmp.ne.s32.totalorder %s76, %s78
    %p82 = scmp.eq.s32.totalorder %s9, 0
    %p83 = por %p81, %p82
    %p84 = scmp.ne.s32.totalorder %s76, %s78
    %p85 = scmp.eq.s32.totalorder %s14, 3
    %p86 = por %p84, %p85
    %p87 = scmp.ne.s32.totalorder %s78, %s79
    %p88 = scmp.eq.s32.totalorder %s14, 0
    %p89 = por %p87, %p88
    %p90 = scmp.ne.s32.totalorder %s78, %s79
    %p91 = scmp.eq.s32.totalorder %s15, 3
    %p92 = por %p90, %p91
    %p94 = scmp.ne.s32.totalorder %s79, %s93
    %p95 = scmp.eq.s32.totalorder %s15, 0
    %p96 = por %p94, %p95
    %s97 = ssub.s32 %s16, %s28
    %s98 = ssub.s32 %s17, %s24
    %s99 = sor.u32 %s97, %s98
    %p100 = scmp.eq.s32.totalorder %s99, 0
    %s102 = sadd.s32 %s101, 1
    %s103 = scalar_select %p100, %s101, %s102
    %p106 = pneg %p100
    %p107 = scmp.eq.s32.totalorder %s9, 3
    %p108 = por %p106, %p107
    %p109 = scmp.ne.s32.totalorder %s101, %s104
    %p110 = scmp.eq.s32.totalorder %s9, 0
    %p111 = por %p109, %p110
    %p112 = scmp.ne.s32.totalorder %s101, %s104
    %p113 = scmp.eq.s32.totalorder %s14, 3
    %p114 = por %p112, %p113
    %p115 = scmp.ne.s32.totalorder %s104, %s105
    %p116 = scmp.eq.s32.totalorder %s14, 0
    %p117 = por %p115, %p116
    %p118 = scmp.ne.s32.totalorder %s104, %s105
    %p119 = scmp.eq.s32.totalorder %s15, 3
    %p120 = por %p118, %p119
    %p122 = scmp.ne.s32.totalorder %s105, %s121
    %p123 = scmp.eq.s32.totalorder %s15, 0
    %p124 = por %p122, %p123
    %p125 = scmp.le.s32.totalorder 1, %s9
    %p126 = scmp.lt.s32.totalorder %s9, 5
    %p127 = pnand %p125, %p126
    %p128 = pneg %p127
    // Predicated region
    $region9: #{separable_conv2d.1} parent=5 // pred_check
      _
    $region10: #{separable_conv2d.1} parent=5 // pred_check_branch
      %130 = sbr.rel (%p127) target = $region12
    $region11: #{separable_conv2d.1} parent=5 // pred_region
      %s131 = ssub.s32 %s9, 1
      // Predicated region
      $region13: #{separable_conv2d.1} parent=11 // pred_check
        %p132 = pneg %p68
      $region14: #{separable_conv2d.1} parent=11 // pred_check_branch
        %134 = sbr.rel (%p132) target = $region16
      $region15: #{separable_conv2d.1} parent=11 // pred_region
        _
      $region16: #{separable_conv2d.1} parent=11 // pred_fallthru
        _
      // Predicated region
      $region17: #{separable_conv2d.1} parent=11 // pred_check
        %p135 = pneg %p89
      $region18: #{separable_conv2d.1} parent=11 // pred_check_branch
        %137 = sbr.rel (%p135) target = $region20
      $region19: #{separable_conv2d.1} parent=11 // pred_region
        _
      $region20: #{separable_conv2d.1} parent=11 // pred_fallthru
        _
    $region12: #{separable_conv2d.1} parent=5 // pred_fallthru
      _
    %p138 = scmp.lt.s32.totalorder %s9, 4
    // Predicated region
    $region21: #{separable_conv2d.1} parent=5 // pred_check
      %p139 = pneg %p138
    $region22: #{separable_conv2d.1} parent=5 // pred_check_branch
      %141 = sbr.rel (%p139) target = $region24
    $region23: #{separable_conv2d.1} parent=5 // pred_region
      // Predicated region
      $region25: #{separable_conv2d.1} parent=23 // pred_check
        %p142 = pneg %p41
      $region26: #{separable_conv2d.1} parent=23 // pred_check_branch
        %144 = sbr.rel (%p142) target = $region28
      $region27: #{separable_conv2d.1} parent=23 // pred_region
        %p145 = scmp.lt.s32.totalorder %s16, 1
        %s146 = scalar_select %p145, %s16, 1
        %s147 = smul.addr %s146, 18
        %s148 = smul.addr %s147, 8
        %s149 = scalar_lea.vmem %s0, %s148
      $region28: #{separable_conv2d.1} parent=23 // pred_fallthru
        _
    $region24: #{separable_conv2d.1} parent=5 // pred_fallthru
      _
    %p150 = scmp.le.s32.totalorder 1, %s9
    %p151 = scmp.lt.s32.totalorder %s9, 5
    %p152 = pnand %p150, %p151
    %p153 = pneg %p152
    // Predicated region
    $region29: #{separable_conv2d.1} parent=5 // pred_check
      _
    $region30: #{separable_conv2d.1} parent=5 // pred_check_branch
      %155 = sbr.rel (%p152) target = $region32
    $region31: #{separable_conv2d.1} parent=5 // pred_region
      %s156 = ssub.s32 %s9, 1
      %p157 = scmp.lt.s32.totalorder %s18, 1
      %s158 = scalar_select %p157, %s18, 1
      %s159 = smul.addr %s158, 18
      %s160 = smul.addr %s159, 8
      %s161 = scalar_lea.vmem %s0, %s160
      %p162 = pneg %p47
      %p163 = pneg %p44
      %p164 = pneg %p68
      %p165 = pneg %p65
      %p166 = pneg %p89
      %p167 = pneg %p86
      %p168 = pneg %p117
      %p169 = pneg %p114
      %s170 = smul.u32 4, %s19
      %p171 = scmp.lt.s32.totalorder %s18, 1
      %s172 = scalar_select %p171, %s18, 1
      %p173 = scmp.lt.s32.totalorder %s170, 7
      %s174 = scalar_select %p173, %s170, 7
      %s175 = smul.addr %s172, 8
      %s176 = sadd.s32 %s174, %s175
      %s177 = smul.addr %s176, 8
      %s178 = scalar_lea.vmem %s3, %s177
      %p179 = scmp.lt.s32.totalorder %s18, 1
      %s180 = scalar_select %p179, %s18, 1
      %s181 = smul.addr %s180, 18
      %s182 = smul.addr %s181, 8
      %s183 = scalar_lea.vmem %s0, %s182
      %s184 = smul.u32 4, %s19
      %p185 = scmp.lt.s32.totalorder %s18, 1
      %s186 = scalar_select %p185, %s18, 1
      %p187 = scmp.lt.s32.totalorder %s184, 7
      %s188 = scalar_select %p187, %s184, 7
      %s189 = smul.addr %s186, 8
      %s190 = sadd.s32 %s188, %s189
      %s191 = smul.addr %s190, 8
      %s192 = scalar_lea.vmem %s3, %s191
      %s193 = smul.u32 4, %s19
      %s194 = smul.u32 %s19, 4
      %s195 = smul.u32 %s194, 16
      %s196 = scalar_lea.vmem %s183, %s195
      %v197 = vld [vmem:[%s196] sm:$0xff]
      %v198 = vld [vmem:[%s196 + $0x8] sm:$0x1]
      %v199 = vld [vmem:[%s196 + $0x10] sm:$0xff]
      %v200 = vld [vmem:[%s196 + $0x18] sm:$0x1]
      %v201 = vld [vmem:[%s196 + $0x20] sm:$0xff]
      %v202 = vld [vmem:[%s196 + $0x28] sm:$0x1]
      %v203 = vld [vmem:[%s196 + $0x30] sm:$0xff]
      %v204 = vld [vmem:[%s196 + $0x38] sm:$0x1]
      %v205 = vld [vmem:[%s196 + $0x40] sm:$0xff]
      %v206 = vld [vmem:[%s196 + $0x48] sm:$0x1]
      %v207 = vld [vmem:[%s1] sm:$0xff]
      %v208 = vld [vmem:[%s1 + $0x8] sm:$0x1]
      %v209 = vlaneseq
      %v210 = vshrl.u32 %v209, 7
      %v211 = vsub.s32 0, %v210
      %v212 = vrot.slane %v207, %v211
      %v213 = vmul.f32 %v197, %v212
      %v214 = vmul.f32 %v199, %v212
      %v215 = vmul.f32 %v201, %v212
      %v216 = vmul.f32 %v203, %v212
      %v217 = vadd.f32 %v213, 0.0
      %v218 = vadd.f32 %v214, 0.0
      %v219 = vadd.f32 %v215, 0.0
      %v220 = vadd.f32 %v216, 0.0
      %v221 = vlaneseq
      %v222 = vshrl.u32 %v221, 7
      %v223 = vsub.s32 1, %v222
      %v224 = vrot.slane %v207, %v223
      %226 = vrot.lane.b32.xlu0 %v224, 4
      %v227 = vpop.permute.xlu0 %226
      %v229 = vmul.f32 %v197, %v227
      %v230 = vmul.f32 %v199, %v227
      %v231 = vmul.f32 %v201, %v227
      %v232 = vmul.f32 %v203, %v227
      %237 = vrot.lane.b32.xlu0 %v229, 124
      %v238 = vpop.permute.xlu0 %237
      %239 = vrot.lane.b32.xlu0 %v230, 124
      %v240 = vpop.permute.xlu0 %239
      %241 = vrot.lane.b32.xlu0 %v231, 124
      %v242 = vpop.permute.xlu0 %241
      %243 = vrot.lane.b32.xlu0 %v232, 124
      %v244 = vpop.permute.xlu0 %243
      %v249 = vadd.f32 %v217, %v238
      %v250 = vadd.f32 %v218, %v240
      %v251 = vadd.f32 %v219, %v242
      %v252 = vadd.f32 %v220, %v244
      %v253 = vlaneseq
      %v254 = vshrl.u32 %v253, 7
      %v255 = vsub.s32 2, %v254
      %v256 = vrot.slane %v207, %v255
      %v257 = vmul.f32 %v197, %v256
      %v258 = vmul.f32 %v198, %v256
      %v259 = vmul.f32 %v199, %v256
      %v260 = vmul.f32 %v200, %v256
      %v261 = vmul.f32 %v201, %v256
      %v262 = vmul.f32 %v202, %v256
      %v263 = vmul.f32 %v203, %v256
      %v264 = vmul.f32 %v204, %v256
      %vm273 = vcmask 1046528
      %v274 = vrot.slane %v257, 1
      %v275 = vrot.slane %v258, 1
      %v276 = vsel %vm273, %v274, %v275
      %v277 = vrot.slane %v259, 1
      %v278 = vrot.slane %v260, 1
      %v279 = vsel %vm273, %v277, %v278
      %v280 = vrot.slane %v261, 1
      %v281 = vrot.slane %v262, 1
      %v282 = vsel %vm273, %v280, %v281
      %v283 = vrot.slane %v263, 1
      %v284 = vrot.slane %v264, 1
      %v285 = vsel %vm273, %v283, %v284
      %v290 = vadd.f32 %v249, %v276
      %v291 = vadd.f32 %v250, %v279
      %v292 = vadd.f32 %v251, %v282
      %v293 = vadd.f32 %v252, %v285
      %v294 = vlaneseq
      %v295 = vshrl.u32 %v294, 7
      %v296 = vsub.s32 3, %v295
      %v297 = vrot.slane %v207, %v296
      %299 = vrot.lane.b32.xlu0 %v297, 8
      %v300 = vpop.permute.xlu0 %299
      %v302 = vmul.f32 %v197, %v300
      %v303 = vmul.f32 %v199, %v300
      %v304 = vmul.f32 %v201, %v300
      %v305 = vmul.f32 %v203, %v300
      %310 = vrot.lane.b32.xlu0 %v302, 120
      %v311 = vpop.permute.xlu0 %310
      %312 = vrot.lane.b32.xlu0 %v303, 120
      %v313 = vpop.permute.xlu0 %312
      %314 = vrot.lane.b32.xlu0 %v304, 120
      %v315 = vpop.permute.xlu0 %314
      %316 = vrot.lane.b32.xlu0 %v305, 120
      %v317 = vpop.permute.xlu0 %316
      %v322 = vadd.f32 %v290, %v311
      %v323 = vadd.f32 %v291, %v313
      %v324 = vadd.f32 %v292, %v315
      %v325 = vadd.f32 %v293, %v317
      %v326 = vlaneseq
      %v327 = vshrl.u32 %v326, 7
      %v328 = vsub.s32 4, %v327
      %v329 = vrot.slane %v207, %v328
      %331 = vrot.lane.b32.xlu0 %v329, 12
      %v332 = vpop.permute.xlu0 %331
      %v334 = vmul.f32 %v197, %v332
      %v335 = vmul.f32 %v199, %v332
      %v336 = vmul.f32 %v201, %v332
      %v337 = vmul.f32 %v203, %v332
      %342 = vrot.lane.b32.xlu0 %v334, 116
      %v343 = vpop.permute.xlu0 %342
      %344 = vrot.lane.b32.xlu0 %v335, 116
      %v345 = vpop.permute.xlu0 %344
      %346 = vrot.lane.b32.xlu0 %v336, 116
      %v347 = vpop.permute.xlu0 %346
      %348 = vrot.lane.b32.xlu0 %v337, 116
      %v349 = vpop.permute.xlu0 %348
      %v354 = vadd.f32 %v322, %v343
      %v355 = vadd.f32 %v323, %v345
      %v356 = vadd.f32 %v324, %v347
      %v357 = vadd.f32 %v325, %v349
      %v358 = vlaneseq
      %v359 = vshrl.u32 %v358, 7
      %v360 = vsub.s32 5, %v359
      %v361 = vrot.slane %v207, %v360
      %363 = vrot.lane.b32.xlu0 %v361, 8
      %v364 = vpop.permute.xlu0 %363
      %v366 = vmul.f32 %v197, %v364
      %v367 = vmul.f32 %v198, %v364
      %v368 = vmul.f32 %v199, %v364
      %v369 = vmul.f32 %v200, %v364
      %v370 = vmul.f32 %v201, %v364
      %v371 = vmul.f32 %v202, %v364
      %v372 = vmul.f32 %v203, %v364
      %v373 = vmul.f32 %v204, %v364
      %v382 = vrot.slane %v366, 1
      %v383 = vrot.slane %v367, 1
      %v384 = vsel %vm273, %v382, %v383
      %v385 = vrot.slane %v368, 1
      %v386 = vrot.slane %v369, 1
      %v387 = vsel %vm273, %v385, %v386
      %v388 = vrot.slane %v370, 1
      %v389 = vrot.slane %v371, 1
      %v390 = vsel %vm273, %v388, %v389
      %v391 = vrot.slane %v372, 1
      %v392 = vrot.slane %v373, 1
      %v393 = vsel %vm273, %v391, %v392
      %394 = vrot.lane.b32.xlu0 %v384, 120
      %v395 = vpop.permute.xlu0 %394
      %396 = vrot.lane.b32.xlu0 %v387, 120
      %v397 = vpop.permute.xlu0 %396
      %398 = vrot.lane.b32.xlu0 %v390, 120
      %v399 = vpop.permute.xlu0 %398
      %400 = vrot.lane.b32.xlu0 %v393, 120
      %v401 = vpop.permute.xlu0 %400
      %v406 = vadd.f32 %v354, %v395
      %v407 = vadd.f32 %v355, %v397
      %v408 = vadd.f32 %v356, %v399
      %v409 = vadd.f32 %v357, %v401
      %v410 = vlaneseq
      %v411 = vshrl.u32 %v410, 7
      %v412 = vsub.s32 6, %v411
      %v413 = vrot.slane %v207, %v412
      %v414 = vmul.f32 %v199, %v413
      %v415 = vmul.f32 %v201, %v413
      %v416 = vmul.f32 %v203, %v413
      %v417 = vmul.f32 %v205, %v413
      %v418 = vadd.f32 %v406, %v414
      %v419 = vadd.f32 %v407, %v415
      %v420 = vadd.f32 %v408, %v416
      %v421 = vadd.f32 %v409, %v417
      %v422 = vlaneseq
      %v423 = vshrl.u32 %v422, 7
      %v424 = vsub.s32 7, %v423
      %v425 = vrot.slane %v207, %v424
      %427 = vrot.lane.b32.xlu0 %v425, 4
      %v428 = vpop.permute.xlu0 %427
      %v430 = vmul.f32 %v199, %v428
      %v431 = vmul.f32 %v201, %v428
      %v432 = vmul.f32 %v203, %v428
      %v433 = vmul.f32 %v205, %v428
      %438 = vrot.lane.b32.xlu0 %v430, 124
      %v439 = vpop.permute.xlu0 %438
      %440 = vrot.lane.b32.xlu0 %v431, 124
      %v441 = vpop.permute.xlu0 %440
      %442 = vrot.lane.b32.xlu0 %v432, 124
      %v443 = vpop.permute.xlu0 %442
      %444 = vrot.lane.b32.xlu0 %v433, 124
      %v445 = vpop.permute.xlu0 %444
      %v450 = vadd.f32 %v418, %v439
      %v451 = vadd.f32 %v419, %v441
      %v452 = vadd.f32 %v420, %v443
      %v453 = vadd.f32 %v421, %v445
      %v454 = vlaneseq
      %v455 = vshrl.u32 %v454, 7
      %v456 = vsub.s32 0, %v455
      %v457 = vrot.slane %v208, %v456
      %v458 = vmul.f32 %v199, %v457
      %v459 = vmul.f32 %v200, %v457
      %v460 = vmul.f32 %v201, %v457
      %v461 = vmul.f32 %v202, %v457
      %v462 = vmul.f32 %v203, %v457
      %v463 = vmul.f32 %v204, %v457
      %v464 = vmul.f32 %v205, %v457
      %v465 = vmul.f32 %v206, %v457
      %v474 = vrot.slane %v458, 1
      %v475 = vrot.slane %v459, 1
      %v476 = vsel %vm273, %v474, %v475
      %v477 = vrot.slane %v460, 1
      %v478 = vrot.slane %v461, 1
      %v479 = vsel %vm273, %v477, %v478
      %v480 = vrot.slane %v462, 1
      %v481 = vrot.slane %v463, 1
      %v482 = vsel %vm273, %v480, %v481
      %v483 = vrot.slane %v464, 1
      %v484 = vrot.slane %v465, 1
      %v485 = vsel %vm273, %v483, %v484
      %v490 = vadd.f32 %v450, %v476
      %v491 = vadd.f32 %v451, %v479
      %v492 = vadd.f32 %v452, %v482
      %v493 = vadd.f32 %v453, %v485
      %v494 = vld [vmem:[%s2] sm:$0xf]
      %vm495 = vcmask 31744
      %v497 = vsel %vm495, %v490, 0
      %v500 = vsel %vm495, %v491, 0
      %v503 = vsel %vm495, %v492, 0
      %v506 = vsel %vm495, %v493, 0
      %vm508 = vcmask 1043456
      %v510 = vsel %vm508, %v494, 0
      %512 = vmatprep.subr.mxu0 0.0
      %513 = vmatpush1.msra.mxu0 %v510
      %514 = vmatprep.subr.mxu0 0.0
      %515 = vmatpush1.msra.mxu0 0.0
      %516 = vmatprep.subr.mxu0 0.0
      %517 = vmatpush1.msra.mxu0 0.0
      %518 = vmatprep.subr.mxu0 0.0
      %519 = vmatpush1.msra.mxu0 0.0
      %520 = vmatprep.subr.mxu0 0.0
      %521 = vmatpush1.msra.mxu0 0.0
      %522 = vmatprep.subr.mxu0 0.0
      %523 = vmatpush1.msra.mxu0 0.0
      %524 = vmatprep.subr.mxu0 0.0
      %525 = vmatpush1.msra.mxu0 0.0
      %526 = vmatprep.subr.mxu0 0.0
      %527 = vmatpush1.msra.mxu0 0.0
      %528 = vmatprep.subr.mxu0 0.0
      %529 = vmatpush1.msra.mxu0 0.0
      %530 = vmatprep.subr.mxu0 0.0
      %531 = vmatpush1.msra.mxu0 0.0
      %532 = vmatprep.subr.mxu0 0.0
      %533 = vmatpush1.msra.mxu0 0.0
      %534 = vmatprep.subr.mxu0 0.0
      %535 = vmatpush1.msra.mxu0 0.0
      %536 = vmatprep.subr.mxu0 0.0
      %537 = vmatpush1.msra.mxu0 0.0
      %538 = vmatprep.subr.mxu0 0.0
      %539 = vmatpush1.msra.mxu0 0.0
      %540 = vmatprep.subr.mxu0 0.0
      %541 = vmatpush1.msra.mxu0 0.0
      %542 = vmatprep.subr.mxu0 0.0
      %543 = vmatpush1.msra.mxu0 0.0
      %544 = vmatprep.subr.mxu0 0.0
      %545 = vmatpush1.msra.mxu0 0.0
      %546 = vmatprep.subr.mxu0 0.0
      %547 = vmatpush1.msra.mxu0 0.0
      %548 = vmatprep.subr.mxu0 0.0
      %549 = vmatpush1.msra.mxu0 0.0
      %550 = vmatprep.subr.mxu0 0.0
      %551 = vmatpush1.msra.mxu0 0.0
      %552 = vmatprep.subr.mxu0 0.0
      %553 = vmatpush1.msra.mxu0 0.0
      %554 = vmatprep.subr.mxu0 0.0
      %555 = vmatpush1.msra.mxu0 0.0
      %556 = vmatprep.subr.mxu0 0.0
      %557 = vmatpush1.msra.mxu0 0.0
      %558 = vmatprep.subr.mxu0 0.0
      %559 = vmatpush1.msra.mxu0 0.0
      %560 = vmatprep.subr.mxu0 0.0
      %561 = vmatpush1.msra.mxu0 0.0
      %562 = vmatprep.subr.mxu0 0.0
      %563 = vmatpush1.msra.mxu0 0.0
      %564 = vmatprep.subr.mxu0 0.0
      %565 = vmatpush1.msra.mxu0 0.0
      %566 = vmatprep.subr.mxu0 0.0
      %567 = vmatpush1.msra.mxu0 0.0
      %568 = vmatprep.subr.mxu0 0.0
      %569 = vmatpush1.msra.mxu0 0.0
      %570 = vmatprep.subr.mxu0 0.0
      %571 = vmatpush1.msra.mxu0 0.0
      %572 = vmatprep.subr.mxu0 0.0
      %573 = vmatpush1.msra.mxu0 0.0
      %574 = vmatprep.subr.mxu0 0.0
      %575 = vmatpush1.msra.mxu0 0.0
      %576 = vmatprep.mubr.f32.mxu0 0.0
      %577 = vmatmul.mubr.f32.gmra.mrb[0].mxu0 %v497
      %v578 = vpop.f32.mrb[0].mxu0
      %v579 = vadd.f32 0.0, %v578
      %v580 = vpop.f32.mrb[0].mxu0
      %581 = vmatprep.mubr.f32.mxu0 0.0
      %582 = vmatmul.mubr.f32.gmra.mrb[0].mxu0 %v500
      %v583 = vpop.f32.mrb[0].mxu0
      %v584 = vadd.f32 0.0, %v583
      %v585 = vpop.f32.mrb[0].mxu0
      %586 = vmatprep.mubr.f32.mxu0 0.0
      %587 = vmatmul.mubr.f32.gmra.mrb[0].mxu0 %v503
      %v588 = vpop.f32.mrb[0].mxu0
      %v589 = vadd.f32 0.0, %v588
      %v590 = vpop.f32.mrb[0].mxu0
      %591 = vmatprep.mubr.f32.mxu0 0.0
      %592 = vmatmul.mubr.f32.gmra.mrb[0].mxu0 %v506
      %v593 = vpop.f32.mrb[0].mxu0
      %v594 = vadd.f32 0.0, %v593
      %v595 = vpop.f32.mrb[0].mxu0
      %596 = vdwg.mxu0
      %vm597 = vcmask 64512
      %598 = vst.msk [vmem:[%s192] sm:$0xff] %vm597, %v579
      %599 = vst.msk [vmem:[%s192 + $0x8] sm:$0xff] %vm597, %v584
      %600 = vst.msk [vmem:[%s192 + $0x10] sm:$0xff] %vm597, %v589
      %601 = vst.msk [vmem:[%s192 + $0x18] sm:$0xff] %vm597, %v594
      %s602 = smul.u32 4, %s19
      %p603 = scmp.lt.s32.totalorder %s18, 1
      %s604 = scalar_select %p603, %s18, 1
      %p605 = scmp.lt.s32.totalorder %s602, 7
      %s606 = scalar_select %p605, %s602, 7
      %s607 = smul.addr %s604, 8
      %s608 = sadd.s32 %s606, %s607
      %s609 = smul.addr %s608, 8
      %s610 = scalar_lea.vmem %s3, %s609
      // Predicated region
      $region33: #{separable_conv2d.1} parent=31 // pred_check
        %p611 = pneg %p114
      $region34: #{separable_conv2d.1} parent=31 // pred_check_branch
        %613 = sbr.rel (%p611) target = $region36
      $region35: #{separable_conv2d.1} parent=31 // pred_region
        %s614 = smul.u32 4, %s19
      $region36: #{separable_conv2d.1} parent=31 // pred_fallthru
        _
    $region32: #{separable_conv2d.1} parent=5 // pred_fallthru
      _
    %p615 = scmp.le.s32.totalorder 2, %s9
    // Predicated region
    $region37: #{separable_conv2d.1} parent=5 // pred_check
      %p616 = pneg %p615
    $region38: #{separable_conv2d.1} parent=5 // pred_check_branch
      %618 = sbr.rel (%p616) target = $region40
    $region39: #{separable_conv2d.1} parent=5 // pred_region
      %s619 = ssub.s32 %s9, 2
      // Predicated region
      $region41: #{separable_conv2d.1} parent=39 // pred_check
        %p620 = pneg %p120
      $region42: #{separable_conv2d.1} parent=39 // pred_check_branch
        %622 = sbr.rel (%p620) target = $region44
      $region43: #{separable_conv2d.1} parent=39 // pred_region
        %s623 = smul.u32 4, %s21
        %p624 = scmp.lt.s32.totalorder %s20, 1
        %s625 = scalar_select %p624, %s20, 1
        %p626 = scmp.lt.s32.totalorder %s623, 7
        %s627 = scalar_select %p626, %s623, 7
        %s628 = smul.addr %s625, 8
        %s629 = sadd.s32 %s627, %s628
        %s630 = smul.addr %s629, 8
        %s631 = scalar_lea.vmem %s3, %s630
      $region44: #{separable_conv2d.1} parent=39 // pred_fallthru
        _
    $region40: #{separable_conv2d.1} parent=5 // pred_fallthru
      _
  $region6: #{separable_conv2d.1} parent=0 // loop_footer
    %s13 = sadd.s32 1, %s9
  $region7: #{separable_conv2d.1} parent=0 // loop_footer_branch
    %8 = sbr.rel target = $region3
  $region8: #{separable_conv2d.1} parent=0 // loop_exit
    _

</llo_original>
